<compile_context>
chip_gen: v6e
topology: v6e:2x2x1
jax: 0.10.0
libtpu: 0.0.40
codegen_flags: <defaults>
</compile_context>

<pallas_src>
import functools

import jax
import jax.numpy as jnp
from jax import lax
from jax.experimental import pallas as pl
from jax.experimental.pallas import tpu as pltpu


def _round_up(n, m):
    return ((n + m - 1) // m) * m


def _supports_bf16_eup():
    """bf16 transcendentals are profitable on v6e / v7x; v5e (and older) stay f32."""
    try:
        kind = jax.devices()[0].device_kind.lower()
    except Exception:
        return False
    return any(tag in kind for tag in ("v6", "v7", "7x"))


def _ode_func_kernel(w1_ref, b1_ref, w2_ref, b2_ref, x_ref, o_ref, *, use_bf16):
    # w1_ref, b1_ref, w2_ref : (H,) SMEM scalars   (Linear(1,H).weight/.bias, Linear(H,1).weight)
    # b2_ref                 : (1,) SMEM scalar    (Linear(H,1).bias)
    # x_ref, o_ref           : (R, L) VMEM tiles   (batch laid out rows x lanes)
    x = x_ref[...]                                            # (R, L) f32
    hidden = w1_ref.shape[0]
    acc0 = jnp.full(x.shape, b2_ref[0], dtype=jnp.float32)    # start from the output bias

    def body(j, acc):
        a = w1_ref[j] * x + b1_ref[j]                         # VPU fma with scalar weights
        if use_bf16:
            h = jnp.tanh(a.astype(jnp.bfloat16)).astype(jnp.float32)   # bf16 EUP tanh
        else:
            h = jnp.tanh(a)                                   # f32 EUP tanh
        return acc + w2_ref[j] * h                            # f32 accumulation

    acc = lax.fori_loop(0, hidden, body, acc0, unroll=True)
    o_ref[...] = acc.astype(o_ref.dtype)


def ode_func(t, x, w1, b1, w2, b2, *, max_tile_elems=32768, lanes=1024,
             use_bf16_tanh=None):
    """Pallas implementation of ODEFunc.forward(t, x).

    `t` is unused (as in the PyTorch module). `x` is (B, 1); returns (B, 1).
    Weights: w1, b1, w2 are (H, 1) columns; b2 is (1, 1).

    max_tile_elems / lanes are the tuning knobs for the gridded (large-batch) path:
    per-step tile = (tile_elems // lanes, lanes) with tile_elems a multiple of 8*lanes.
    """
    del t
    B = x.shape[0]
    H = w1.shape[0]
    if use_bf16_tanh is None:
        use_bf16_tanh = _supports_bf16_eup()

    w1f = w1.reshape(H).astype(jnp.float32)
    b1f = b1.reshape(H).astype(jnp.float32)
    w2f = w2.reshape(H).astype(jnp.float32)
    b2f = b2.reshape(1).astype(jnp.float32)
    xf = x.reshape(B).astype(jnp.float32)

    kernel = functools.partial(_ode_func_kernel, use_bf16=use_bf16_tanh)
    smem_spec = pl.BlockSpec(memory_space=pltpu.MemorySpace.SMEM)

    granule = 8 * lanes  # smallest legal (8, 128)-aligned tile at this lane width

    if B >= 2 * granule:
        # ---- Large batch: padded, 2-D (rows x lanes), 1-D "parallel" grid over row blocks.
        # Pick the tile so that (a) it is <= max_tile_elems, (b) it is a multiple of
        # 8*lanes, and (c) there are at least 2 grid steps (v7x has 2 TensorCores).
        n_tiles_target = max(2, pl.cdiv(B, max_tile_elems))
        tile_elems = _round_up(pl.cdiv(B, n_tiles_target), granule)
        tile_elems = min(tile_elems, _round_up(max_tile_elems, granule))
        n_tiles = pl.cdiv(B, tile_elems)
        padded = n_tiles * tile_elems

        xp = jnp.pad(xf, (0, padded - B))                  # zero padding; extra rows discarded
        rows = padded // lanes
        tile_rows = tile_elems // lanes                    # multiple of 8
        x2 = xp.reshape(rows, lanes)

        y2 = pl.pallas_call(
            kernel,
            out_shape=jax.ShapeDtypeStruct((rows, lanes), jnp.float32),
            grid=(n_tiles,),
            in_specs=[
                smem_spec,                                 # w1 (H,)  scalars, resident
                smem_spec,                                 # b1 (H,)
                smem_spec,                                 # w2 (H,)
                smem_spec,                                 # b2 (1,)
                pl.BlockSpec((tile_rows, lanes), lambda i: (i, 0)),   # x tile
            ],
            out_specs=pl.BlockSpec((tile_rows, lanes), lambda i: (i, 0)),
            compiler_params=pltpu.CompilerParams(
                dimension_semantics=("parallel",)),
        )(w1f, b1f, w2f, b2f, x2)
        y = y2.reshape(padded)[:B]
    else:
        # ---- Small batch: single invocation, no grid (launch overhead dominates anyway).
        if B % (8 * 128) == 0 and B > 0:
            x2 = xf.reshape(B // 128, 128)                 # fully dense vregs when possible
        else:
            x2 = xf.reshape(1, B)
        y2 = pl.pallas_call(
            kernel,
            out_shape=jax.ShapeDtypeStruct(x2.shape, jnp.float32),
            in_specs=[
                smem_spec, smem_spec, smem_spec, smem_spec,
                pl.BlockSpec(memory_space=pltpu.MemorySpace.VMEM),
            ],
            out_specs=pl.BlockSpec(memory_space=pltpu.MemorySpace.VMEM),
        )(w1f, b1f, w2f, b2f, x2)
        y = y2.reshape(B)

    return y.reshape(B, 1)


def init_params(key, hidden_dim=16):
    """Deterministic init mirroring nn.Linear's U(-1/sqrt(fan_in), 1/sqrt(fan_in))."""
    k1, k2, k3, k4 = jax.random.split(key, 4)
    bound1 = 1.0                                  # fan_in = 1
    bound2 = 1.0 / jnp.sqrt(float(hidden_dim))    # fan_in = hidden_dim
    w1 = jax.random.uniform(k1, (hidden_dim, 1), jnp.float32, -bound1, bound1)
    b1 = jax.random.uniform(k2, (hidden_dim, 1), jnp.float32, -bound1, bound1)
    w2 = jax.random.uniform(k3, (hidden_dim, 1), jnp.float32, -bound2, bound2)
    b2 = jax.random.uniform(k4, (1, 1), jnp.float32, -bound2, bound2)
    return w1, b1, w2, b2


def ode_func_ref(t, x, w1, b1, w2, b2):
    """Pure-JAX reference with PyTorch semantics: Linear(1,H) -> Tanh -> Linear(H,1)."""
    del t
    h = jnp.tanh(x @ w1.T + b1.T)   # (B, H)
    return h @ w2 + b2              # (B, 1)


if __name__ == "__main__":
    key = jax.random.PRNGKey(0)
    kx, kx2, kp = jax.random.split(key, 3)

    hidden_dim = 16
    t = jnp.float32(0.0)                                  # unused by the net
    w1, b1, w2, b2 = init_params(kp, hidden_dim)

    # --- Small batch (un-gridded path), strict f32 check.
    batch = 8
    x = jax.random.normal(kx, (batch, 1), jnp.float32)
    out = jax.block_until_ready(ode_func(t, x, w1, b1, w2, b2, use_bf16_tanh=False))
    ref = ode_func_ref(t, x, w1, b1, w2, b2)
    assert out.shape == (batch, 1)
    assert jnp.allclose(out, ref, atol=1e-5, rtol=1e-5), (out, ref)

    # --- Larger, non-divisible batch exercising the padded "parallel"-grid path (f32).
    big = 10000
    x_big = jax.random.normal(kx2, (big, 1), jnp.float32)
    out_big = jax.block_until_ready(
        ode_func(t, x_big, w1, b1, w2, b2,
                 max_tile_elems=8192, lanes=512, use_bf16_tanh=False))
    ref_big = ode_func_ref(t, x_big, w1, b1, w2, b2)
    assert out_big.shape == (big, 1)
    assert jnp.allclose(out_big, ref_big, atol=1e-5, rtol=1e-5)

    # --- bf16-tanh EUP path (auto-enabled on v6e / v7x only); bf16 carries ~3 decimal
    #     digits, so validate against the f32 reference with a loose tolerance.
    if _supports_bf16_eup():
        out_bf16 = jax.block_until_ready(
            ode_func(t, x_big, w1, b1, w2, b2,
                     max_tile_elems=8192, lanes=512, use_bf16_tanh=True))
        assert jnp.allclose(out_bf16, ref_big, atol=1e-1, rtol=1e-1)

    print("KERNEL_OK")
</pallas_src>

<mosaic_0001>
module attributes {stable_mosaic.version = 11 : i64} {
  func.func @_ode_func_kernel(%arg0: memref<16xf32, #tpu.memory_space<smem>>, %arg1: memref<16xf32, #tpu.memory_space<smem>>, %arg2: memref<16xf32, #tpu.memory_space<smem>>, %arg3: memref<1xf32, #tpu.memory_space<smem>>, %arg4: memref<1x8xf32, #tpu.memory_space<vmem>>, %arg5: memref<1x8xf32, #tpu.memory_space<vmem>>) attributes {dimension_semantics = [], scalar_prefetch = 0 : i64, scratch_operands = 0 : i64, tpu.core_type = #tpu.core_type<tc>} {
    %c0 = arith.constant 0 : index
    %c0_0 = arith.constant 0 : index
    %0 = vector.load %arg4[%c0, %c0_0] : memref<1x8xf32, #tpu.memory_space<vmem>>, vector<1x8xf32>
    %c0_1 = arith.constant 0 : index
    %1 = memref.load %arg3[%c0_1] : memref<1xf32, #tpu.memory_space<smem>>
    %2 = vector.broadcast %1 : f32 to vector<1x8xf32>
    %c0_i32 = arith.constant 0 : i32
    %3 = arith.index_cast %c0_i32 : i32 to index
    %4 = memref.load %arg0[%3] : memref<16xf32, #tpu.memory_space<smem>>
    %5 = vector.broadcast %4 : f32 to vector<1x8xf32>
    %6 = arith.mulf %5, %0 : vector<1x8xf32>
    %7 = arith.index_cast %c0_i32 : i32 to index
    %8 = memref.load %arg1[%7] : memref<16xf32, #tpu.memory_space<smem>>
    %9 = vector.broadcast %8 : f32 to vector<1x8xf32>
    %10 = arith.addf %6, %9 : vector<1x8xf32>
    %11 = math.tanh %10 : vector<1x8xf32>
    %12 = arith.index_cast %c0_i32 : i32 to index
    %13 = memref.load %arg2[%12] : memref<16xf32, #tpu.memory_space<smem>>
    %14 = vector.broadcast %13 : f32 to vector<1x8xf32>
    %15 = arith.mulf %14, %11 : vector<1x8xf32>
    %16 = arith.addf %2, %15 : vector<1x8xf32>
    %c1_i32 = arith.constant 1 : i32
    %17 = arith.index_cast %c1_i32 : i32 to index
    %18 = memref.load %arg0[%17] : memref<16xf32, #tpu.memory_space<smem>>
    %19 = vector.broadcast %18 : f32 to vector<1x8xf32>
    %20 = arith.mulf %19, %0 : vector<1x8xf32>
    %21 = arith.index_cast %c1_i32 : i32 to index
    %22 = memref.load %arg1[%21] : memref<16xf32, #tpu.memory_space<smem>>
    %23 = vector.broadcast %22 : f32 to vector<1x8xf32>
    %24 = arith.addf %20, %23 : vector<1x8xf32>
    %25 = math.tanh %24 : vector<1x8xf32>
    %26 = arith.index_cast %c1_i32 : i32 to index
    %27 = memref.load %arg2[%26] : memref<16xf32, #tpu.memory_space<smem>>
    %28 = vector.broadcast %27 : f32 to vector<1x8xf32>
    %29 = arith.mulf %28, %25 : vector<1x8xf32>
    %30 = arith.addf %16, %29 : vector<1x8xf32>
    %c2_i32 = arith.constant 2 : i32
    %31 = arith.index_cast %c2_i32 : i32 to index
    %32 = memref.load %arg0[%31] : memref<16xf32, #tpu.memory_space<smem>>
    %33 = vector.broadcast %32 : f32 to vector<1x8xf32>
    %34 = arith.mulf %33, %0 : vector<1x8xf32>
    %35 = arith.index_cast %c2_i32 : i32 to index
    %36 = memref.load %arg1[%35] : memref<16xf32, #tpu.memory_space<smem>>
    %37 = vector.broadcast %36 : f32 to vector<1x8xf32>
    %38 = arith.addf %34, %37 : vector<1x8xf32>
    %39 = math.tanh %38 : vector<1x8xf32>
    %40 = arith.index_cast %c2_i32 : i32 to index
    %41 = memref.load %arg2[%40] : memref<16xf32, #tpu.memory_space<smem>>
    %42 = vector.broadcast %41 : f32 to vector<1x8xf32>
    %43 = arith.mulf %42, %39 : vector<1x8xf32>
    %44 = arith.addf %30, %43 : vector<1x8xf32>
    %c3_i32 = arith.constant 3 : i32
    %45 = arith.index_cast %c3_i32 : i32 to index
    %46 = memref.load %arg0[%45] : memref<16xf32, #tpu.memory_space<smem>>
    %47 = vector.broadcast %46 : f32 to vector<1x8xf32>
    %48 = arith.mulf %47, %0 : vector<1x8xf32>
    %49 = arith.index_cast %c3_i32 : i32 to index
    %50 = memref.load %arg1[%49] : memref<16xf32, #tpu.memory_space<smem>>
    %51 = vector.broadcast %50 : f32 to vector<1x8xf32>
    %52 = arith.addf %48, %51 : vector<1x8xf32>
    %53 = math.tanh %52 : vector<1x8xf32>
    %54 = arith.index_cast %c3_i32 : i32 to index
    %55 = memref.load %arg2[%54] : memref<16xf32, #tpu.memory_space<smem>>
    %56 = vector.broadcast %55 : f32 to vector<1x8xf32>
    %57 = arith.mulf %56, %53 : vector<1x8xf32>
    %58 = arith.addf %44, %57 : vector<1x8xf32>
    %c4_i32 = arith.constant 4 : i32
    %59 = arith.index_cast %c4_i32 : i32 to index
    %60 = memref.load %arg0[%59] : memref<16xf32, #tpu.memory_space<smem>>
    %61 = vector.broadcast %60 : f32 to vector<1x8xf32>
    %62 = arith.mulf %61, %0 : vector<1x8xf32>
    %63 = arith.index_cast %c4_i32 : i32 to index
    %64 = memref.load %arg1[%63] : memref<16xf32, #tpu.memory_space<smem>>
    %65 = vector.broadcast %64 : f32 to vector<1x8xf32>
    %66 = arith.addf %62, %65 : vector<1x8xf32>
    %67 = math.tanh %66 : vector<1x8xf32>
    %68 = arith.index_cast %c4_i32 : i32 to index
    %69 = memref.load %arg2[%68] : memref<16xf32, #tpu.memory_space<smem>>
    %70 = vector.broadcast %69 : f32 to vector<1x8xf32>
    %71 = arith.mulf %70, %67 : vector<1x8xf32>
    %72 = arith.addf %58, %71 : vector<1x8xf32>
    %c5_i32 = arith.constant 5 : i32
    %73 = arith.index_cast %c5_i32 : i32 to index
    %74 = memref.load %arg0[%73] : memref<16xf32, #tpu.memory_space<smem>>
    %75 = vector.broadcast %74 : f32 to vector<1x8xf32>
    %76 = arith.mulf %75, %0 : vector<1x8xf32>
    %77 = arith.index_cast %c5_i32 : i32 to index
    %78 = memref.load %arg1[%77] : memref<16xf32, #tpu.memory_space<smem>>
    %79 = vector.broadcast %78 : f32 to vector<1x8xf32>
    %80 = arith.addf %76, %79 : vector<1x8xf32>
    %81 = math.tanh %80 : vector<1x8xf32>
    %82 = arith.index_cast %c5_i32 : i32 to index
    %83 = memref.load %arg2[%82] : memref<16xf32, #tpu.memory_space<smem>>
    %84 = vector.broadcast %83 : f32 to vector<1x8xf32>
    %85 = arith.mulf %84, %81 : vector<1x8xf32>
    %86 = arith.addf %72, %85 : vector<1x8xf32>
    %c6_i32 = arith.constant 6 : i32
    %87 = arith.index_cast %c6_i32 : i32 to index
    %88 = memref.load %arg0[%87] : memref<16xf32, #tpu.memory_space<smem>>
    %89 = vector.broadcast %88 : f32 to vector<1x8xf32>
    %90 = arith.mulf %89, %0 : vector<1x8xf32>
    %91 = arith.index_cast %c6_i32 : i32 to index
    %92 = memref.load %arg1[%91] : memref<16xf32, #tpu.memory_space<smem>>
    %93 = vector.broadcast %92 : f32 to vector<1x8xf32>
    %94 = arith.addf %90, %93 : vector<1x8xf32>
    %95 = math.tanh %94 : vector<1x8xf32>
    %96 = arith.index_cast %c6_i32 : i32 to index
    %97 = memref.load %arg2[%96] : memref<16xf32, #tpu.memory_space<smem>>
    %98 = vector.broadcast %97 : f32 to vector<1x8xf32>
    %99 = arith.mulf %98, %95 : vector<1x8xf32>
    %100 = arith.addf %86, %99 : vector<1x8xf32>
    %c7_i32 = arith.constant 7 : i32
    %101 = arith.index_cast %c7_i32 : i32 to index
    %102 = memref.load %arg0[%101] : memref<16xf32, #tpu.memory_space<smem>>
    %103 = vector.broadcast %102 : f32 to vector<1x8xf32>
    %104 = arith.mulf %103, %0 : vector<1x8xf32>
    %105 = arith.index_cast %c7_i32 : i32 to index
    %106 = memref.load %arg1[%105] : memref<16xf32, #tpu.memory_space<smem>>
    %107 = vector.broadcast %106 : f32 to vector<1x8xf32>
    %108 = arith.addf %104, %107 : vector<1x8xf32>
    %109 = math.tanh %108 : vector<1x8xf32>
    %110 = arith.index_cast %c7_i32 : i32 to index
    %111 = memref.load %arg2[%110] : memref<16xf32, #tpu.memory_space<smem>>
    %112 = vector.broadcast %111 : f32 to vector<1x8xf32>
    %113 = arith.mulf %112, %109 : vector<1x8xf32>
    %114 = arith.addf %100, %113 : vector<1x8xf32>
    %c8_i32 = arith.constant 8 : i32
    %115 = arith.index_cast %c8_i32 : i32 to index
    %116 = memref.load %arg0[%115] : memref<16xf32, #tpu.memory_space<smem>>
    %117 = vector.broadcast %116 : f32 to vector<1x8xf32>
    %118 = arith.mulf %117, %0 : vector<1x8xf32>
    %119 = arith.index_cast %c8_i32 : i32 to index
    %120 = memref.load %arg1[%119] : memref<16xf32, #tpu.memory_space<smem>>
    %121 = vector.broadcast %120 : f32 to vector<1x8xf32>
    %122 = arith.addf %118, %121 : vector<1x8xf32>
    %123 = math.tanh %122 : vector<1x8xf32>
    %124 = arith.index_cast %c8_i32 : i32 to index
    %125 = memref.load %arg2[%124] : memref<16xf32, #tpu.memory_space<smem>>
    %126 = vector.broadcast %125 : f32 to vector<1x8xf32>
    %127 = arith.mulf %126, %123 : vector<1x8xf32>
    %128 = arith.addf %114, %127 : vector<1x8xf32>
    %c9_i32 = arith.constant 9 : i32
    %129 = arith.index_cast %c9_i32 : i32 to index
    %130 = memref.load %arg0[%129] : memref<16xf32, #tpu.memory_space<smem>>
    %131 = vector.broadcast %130 : f32 to vector<1x8xf32>
    %132 = arith.mulf %131, %0 : vector<1x8xf32>
    %133 = arith.index_cast %c9_i32 : i32 to index
    %134 = memref.load %arg1[%133] : memref<16xf32, #tpu.memory_space<smem>>
    %135 = vector.broadcast %134 : f32 to vector<1x8xf32>
    %136 = arith.addf %132, %135 : vector<1x8xf32>
    %137 = math.tanh %136 : vector<1x8xf32>
    %138 = arith.index_cast %c9_i32 : i32 to index
    %139 = memref.load %arg2[%138] : memref<16xf32, #tpu.memory_space<smem>>
    %140 = vector.broadcast %139 : f32 to vector<1x8xf32>
    %141 = arith.mulf %140, %137 : vector<1x8xf32>
    %142 = arith.addf %128, %141 : vector<1x8xf32>
    %c10_i32 = arith.constant 10 : i32
    %143 = arith.index_cast %c10_i32 : i32 to index
    %144 = memref.load %arg0[%143] : memref<16xf32, #tpu.memory_space<smem>>
    %145 = vector.broadcast %144 : f32 to vector<1x8xf32>
    %146 = arith.mulf %145, %0 : vector<1x8xf32>
    %147 = arith.index_cast %c10_i32 : i32 to index
    %148 = memref.load %arg1[%147] : memref<16xf32, #tpu.memory_space<smem>>
    %149 = vector.broadcast %148 : f32 to vector<1x8xf32>
    %150 = arith.addf %146, %149 : vector<1x8xf32>
    %151 = math.tanh %150 : vector<1x8xf32>
    %152 = arith.index_cast %c10_i32 : i32 to index
    %153 = memref.load %arg2[%152] : memref<16xf32, #tpu.memory_space<smem>>
    %154 = vector.broadcast %153 : f32 to vector<1x8xf32>
    %155 = arith.mulf %154, %151 : vector<1x8xf32>
    %156 = arith.addf %142, %155 : vector<1x8xf32>
    %c11_i32 = arith.constant 11 : i32
    %157 = arith.index_cast %c11_i32 : i32 to index
    %158 = memref.load %arg0[%157] : memref<16xf32, #tpu.memory_space<smem>>
    %159 = vector.broadcast %158 : f32 to vector<1x8xf32>
    %160 = arith.mulf %159, %0 : vector<1x8xf32>
    %161 = arith.index_cast %c11_i32 : i32 to index
    %162 = memref.load %arg1[%161] : memref<16xf32, #tpu.memory_space<smem>>
    %163 = vector.broadcast %162 : f32 to vector<1x8xf32>
    %164 = arith.addf %160, %163 : vector<1x8xf32>
    %165 = math.tanh %164 : vector<1x8xf32>
    %166 = arith.index_cast %c11_i32 : i32 to index
    %167 = memref.load %arg2[%166] : memref<16xf32, #tpu.memory_space<smem>>
    %168 = vector.broadcast %167 : f32 to vector<1x8xf32>
    %169 = arith.mulf %168, %165 : vector<1x8xf32>
    %170 = arith.addf %156, %169 : vector<1x8xf32>
    %c12_i32 = arith.constant 12 : i32
    %171 = arith.index_cast %c12_i32 : i32 to index
    %172 = memref.load %arg0[%171] : memref<16xf32, #tpu.memory_space<smem>>
    %173 = vector.broadcast %172 : f32 to vector<1x8xf32>
    %174 = arith.mulf %173, %0 : vector<1x8xf32>
    %175 = arith.index_cast %c12_i32 : i32 to index
    %176 = memref.load %arg1[%175] : memref<16xf32, #tpu.memory_space<smem>>
    %177 = vector.broadcast %176 : f32 to vector<1x8xf32>
    %178 = arith.addf %174, %177 : vector<1x8xf32>
    %179 = math.tanh %178 : vector<1x8xf32>
    %180 = arith.index_cast %c12_i32 : i32 to index
    %181 = memref.load %arg2[%180] : memref<16xf32, #tpu.memory_space<smem>>
    %182 = vector.broadcast %181 : f32 to vector<1x8xf32>
    %183 = arith.mulf %182, %179 : vector<1x8xf32>
    %184 = arith.addf %170, %183 : vector<1x8xf32>
    %c13_i32 = arith.constant 13 : i32
    %185 = arith.index_cast %c13_i32 : i32 to index
    %186 = memref.load %arg0[%185] : memref<16xf32, #tpu.memory_space<smem>>
    %187 = vector.broadcast %186 : f32 to vector<1x8xf32>
    %188 = arith.mulf %187, %0 : vector<1x8xf32>
    %189 = arith.index_cast %c13_i32 : i32 to index
    %190 = memref.load %arg1[%189] : memref<16xf32, #tpu.memory_space<smem>>
    %191 = vector.broadcast %190 : f32 to vector<1x8xf32>
    %192 = arith.addf %188, %191 : vector<1x8xf32>
    %193 = math.tanh %192 : vector<1x8xf32>
    %194 = arith.index_cast %c13_i32 : i32 to index
    %195 = memref.load %arg2[%194] : memref<16xf32, #tpu.memory_space<smem>>
    %196 = vector.broadcast %195 : f32 to vector<1x8xf32>
    %197 = arith.mulf %196, %193 : vector<1x8xf32>
    %198 = arith.addf %184, %197 : vector<1x8xf32>
    %c14_i32 = arith.constant 14 : i32
    %199 = arith.index_cast %c14_i32 : i32 to index
    %200 = memref.load %arg0[%199] : memref<16xf32, #tpu.memory_space<smem>>
    %201 = vector.broadcast %200 : f32 to vector<1x8xf32>
    %202 = arith.mulf %201, %0 : vector<1x8xf32>
    %203 = arith.index_cast %c14_i32 : i32 to index
    %204 = memref.load %arg1[%203] : memref<16xf32, #tpu.memory_space<smem>>
    %205 = vector.broadcast %204 : f32 to vector<1x8xf32>
    %206 = arith.addf %202, %205 : vector<1x8xf32>
    %207 = math.tanh %206 : vector<1x8xf32>
    %208 = arith.index_cast %c14_i32 : i32 to index
    %209 = memref.load %arg2[%208] : memref<16xf32, #tpu.memory_space<smem>>
    %210 = vector.broadcast %209 : f32 to vector<1x8xf32>
    %211 = arith.mulf %210, %207 : vector<1x8xf32>
    %212 = arith.addf %198, %211 : vector<1x8xf32>
    %c15_i32 = arith.constant 15 : i32
    %213 = arith.index_cast %c15_i32 : i32 to index
    %214 = memref.load %arg0[%213] : memref<16xf32, #tpu.memory_space<smem>>
    %215 = vector.broadcast %214 : f32 to vector<1x8xf32>
    %216 = arith.mulf %215, %0 : vector<1x8xf32>
    %217 = arith.index_cast %c15_i32 : i32 to index
    %218 = memref.load %arg1[%217] : memref<16xf32, #tpu.memory_space<smem>>
    %219 = vector.broadcast %218 : f32 to vector<1x8xf32>
    %220 = arith.addf %216, %219 : vector<1x8xf32>
    %221 = math.tanh %220 : vector<1x8xf32>
    %222 = arith.index_cast %c15_i32 : i32 to index
    %223 = memref.load %arg2[%222] : memref<16xf32, #tpu.memory_space<smem>>
    %224 = vector.broadcast %223 : f32 to vector<1x8xf32>
    %225 = arith.mulf %224, %221 : vector<1x8xf32>
    %226 = arith.addf %212, %225 : vector<1x8xf32>
    %c16_i32 = arith.constant 16 : i32
    %c0_2 = arith.constant 0 : index
    %c0_3 = arith.constant 0 : index
    %227 = vector.load %arg5[%c0_2, %c0_3] : memref<1x8xf32, #tpu.memory_space<vmem>>, vector<1x8xf32>
    tpu.vector_store %arg5[%c0_2, %c0_3], %226 {strides = array<i32>} : memref<1x8xf32, #tpu.memory_space<vmem>>, vector<1x8xf32>,
    return
  }
}

</mosaic_0001>

<llo_original>
// kernel: tpu_custom_call.1
$region0: #{tpu_custom_call.1}
  #allocation0 [shape = 'u32[]', space=smem, size = 0x4, offset = 0x4, fixed_abs, tag = 'smem constant byte address 0x4 - core index']
  #allocation1 [shape = 'u32[144,128]{1,0:T(1,128)}', space=vmem, size = 0x12000, scoped, tag = 'internal scratch']
  #allocation2 [shape = 'f32[1]{0:T(128)S(6)}', space=smem, size = 0x200, scoped, tag = 'scoped memory for tpu_custom_call.1']
  %s0 = inlined_call_operand.vmem [shape: f32[16], index: 0, kind: input, shape index: {}]
  %s1 = inlined_call_operand.vmem [shape: f32[16], index: 1, kind: input, shape index: {}]
  %s2 = inlined_call_operand.vmem [shape: f32[16], index: 2, kind: input, shape index: {}]
  %s3 = inlined_call_operand.<no memory space> [shape: f32[1], index: 3, kind: input, shape index: {}]
  %s4 = inlined_call_operand.vmem [shape: f32[1,8], index: 4, kind: input, shape index: {}]
  %s5 = inlined_call_operand.hbm [shape: f32[1,8], index: 5, kind: output, shape index: {}]
  %s6 = sld [smem:[#allocation0]]
  $region42: #{tpu_custom_call.1} parent=0
    _
  %s8 = ssub.s32 1, %s6
  %s9 = scalar_select 0, %s8, %s6
  %10 = sst [smem:[#allocation2]] %s3
  $region1: #{tpu_custom_call.1} parent=0
    #allocation3 [shape = 'u8[512]{0}', space=smem, size = 0x200, scoped, tag = 'input window, operand 0, single buffered']
    #allocation4 [shape = 's32[1]{0}', space=sflag, size = 0x4, scoped, tag = 'scoped memory for tpu_custom_call.1']
    #allocation5 [shape = 's32[1]{0}', space=sflag, size = 0x4, scoped, tag = 'scoped memory for tpu_custom_call.1']
    #allocation6 [shape = 'u8[512]{0}', space=smem, size = 0x200, scoped, tag = 'input window, operand 1, single buffered']
    #allocation7 [shape = 's32[1]{0}', space=sflag, size = 0x4, scoped, tag = 'scoped memory for tpu_custom_call.1']
    #allocation8 [shape = 'u8[512]{0}', space=smem, size = 0x200, scoped, tag = 'input window, operand 2, single buffered']
    #allocation9 [shape = 'u8[512]{0}', space=vmem, size = 0x400, scoped, tag = 'output window, operand 0, single buffered']
    %11 = vsyncpa [#allocation5], 0
    %12 = vsyncpa [#allocation7], 0
    %13 = vsyncpa [#allocation4], 0
    // Predicated region
    $region2: #{tpu_custom_call.1} parent=1 // pred_check
      _
    $region3: #{tpu_custom_call.1} parent=1 // pred_check_branch
      %15 = sbr.rel (0) target = $region5
    $region4: #{tpu_custom_call.1} parent=1 // pred_region
      %s17 = ssub.s32 16, 16
      %18 = vsyncadd [#allocation5], %s17
      %s20 = sshll.u32 %s0, 4
      %s21 = int_to_ptr.vmem [resolvable:$true] %s20
      %23 = dma.vmem_to_smem %s21, 16, [#allocation3], [#allocation5]
    $region5: #{tpu_custom_call.1} parent=1 // pred_fallthru
      _
    // Predicated region
    $region6: #{tpu_custom_call.1} parent=1 // pred_check
      _
    $region7: #{tpu_custom_call.1} parent=1 // pred_check_branch
      %25 = sbr.rel (0) target = $region9
    $region8: #{tpu_custom_call.1} parent=1 // pred_region
      %s27 = ssub.s32 16, 16
      %28 = vsyncadd [#allocation7], %s27
      %s30 = sshll.u32 %s1, 4
      %s31 = int_to_ptr.vmem [resolvable:$true] %s30
      %33 = dma.vmem_to_smem %s31, 16, [#allocation6], [#allocation7]
    $region9: #{tpu_custom_call.1} parent=1 // pred_fallthru
      _
    // Predicated region
    $region10: #{tpu_custom_call.1} parent=1 // pred_check
      _
    $region11: #{tpu_custom_call.1} parent=1 // pred_check_branch
      %35 = sbr.rel (0) target = $region13
    $region12: #{tpu_custom_call.1} parent=1 // pred_region
      %s37 = ssub.s32 16, 16
      %38 = vsyncadd [#allocation7], %s37
      %s40 = sshll.u32 %s2, 4
      %s41 = int_to_ptr.vmem [resolvable:$true] %s40
      %43 = dma.vmem_to_smem %s41, 16, [#allocation8], [#allocation7]
    $region13: #{tpu_custom_call.1} parent=1 // pred_fallthru
      _
    // Predicated region
    $region14: #{tpu_custom_call.1} parent=1 // pred_check
      _
    $region15: #{tpu_custom_call.1} parent=1 // pred_check_branch
      %45 = sbr.rel (0) target = $region17
    $region16: #{tpu_custom_call.1} parent=1 // pred_region
      _
    $region17: #{tpu_custom_call.1} parent=1 // pred_fallthru
      _
    // Predicated region
    $region18: #{tpu_custom_call.1} parent=1 // pred_check
      _
    $region19: #{tpu_custom_call.1} parent=1 // pred_check_branch
      %47 = sbr.rel (0) target = $region21
    $region20: #{tpu_custom_call.1} parent=1 // pred_region
      _
    $region21: #{tpu_custom_call.1} parent=1 // pred_fallthru
      _
    // Predicated region
    $region22: #{tpu_custom_call.1} parent=1 // pred_check
      _
    $region23: #{tpu_custom_call.1} parent=1 // pred_check_branch
      %49 = sbr.rel (0) target = $region25
    $region24: #{tpu_custom_call.1} parent=1 // pred_region
      %50 = dma.done [#allocation5], 16
    $region25: #{tpu_custom_call.1} parent=1 // pred_fallthru
      _
    // Predicated region
    $region26: #{tpu_custom_call.1} parent=1 // pred_check
      _
    $region27: #{tpu_custom_call.1} parent=1 // pred_check_branch
      %52 = sbr.rel (0) target = $region29
    $region28: #{tpu_custom_call.1} parent=1 // pred_region
      %53 = dma.done [#allocation7], 16
    $region29: #{tpu_custom_call.1} parent=1 // pred_fallthru
      _
    // Predicated region
    $region30: #{tpu_custom_call.1} parent=1 // pred_check
      _
    $region31: #{tpu_custom_call.1} parent=1 // pred_check_branch
      %55 = sbr.rel (0) target = $region33
    $region32: #{tpu_custom_call.1} parent=1 // pred_region
      %56 = dma.done [#allocation7], 16
    $region33: #{tpu_custom_call.1} parent=1 // pred_fallthru
      _
    %57 = sfence
    %v58 = vld [vmem:[%s4] sm:$0x1]
    %s59 = sld [smem:[#allocation2]]
    %v60 = vstv %s59
    %s61 = sld [smem:[#allocation3]]
    %v62 = vstv %s61
    %v63 = vmul.f32 %v62, %v58
    %s64 = sld [smem:[#allocation6]]
    %v65 = vstv %s64
    %v66 = vadd.f32 %v63, %v65
    %v67 = vtanh.pop %v66
    %s68 = sld [smem:[#allocation8]]
    %v69 = vstv %s68
    %v70 = vmul.f32 %v69, %v67
    %v71 = vadd.f32 %v60, %v70
    %s72 = sld [smem:[#allocation3 + $0x1]]
    %v73 = vstv %s72
    %v74 = vmul.f32 %v73, %v58
    %s75 = sld [smem:[#allocation6 + $0x1]]
    %v76 = vstv %s75
    %v77 = vadd.f32 %v74, %v76
    %v78 = vtanh.pop %v77
    %s79 = sld [smem:[#allocation8 + $0x1]]
    %v80 = vstv %s79
    %v81 = vmul.f32 %v80, %v78
    %v82 = vadd.f32 %v71, %v81
    %s83 = sld [smem:[#allocation3 + $0x2]]
    %v84 = vstv %s83
    %v85 = vmul.f32 %v84, %v58
    %s86 = sld [smem:[#allocation6 + $0x2]]
    %v87 = vstv %s86
    %v88 = vadd.f32 %v85, %v87
    %v89 = vtanh.pop %v88
    %s90 = sld [smem:[#allocation8 + $0x2]]
    %v91 = vstv %s90
    %v92 = vmul.f32 %v91, %v89
    %v93 = vadd.f32 %v82, %v92
    %s94 = sld [smem:[#allocation3 + $0x3]]
    %v95 = vstv %s94
    %v96 = vmul.f32 %v95, %v58
    %s97 = sld [smem:[#allocation6 + $0x3]]
    %v98 = vstv %s97
    %v99 = vadd.f32 %v96, %v98
    %v100 = vtanh.pop %v99
    %s101 = sld [smem:[#allocation8 + $0x3]]
    %v102 = vstv %s101
    %v103 = vmul.f32 %v102, %v100
    %v104 = vadd.f32 %v93, %v103
    %s105 = sld [smem:[#allocation3 + $0x4]]
    %v106 = vstv %s105
    %v107 = vmul.f32 %v106, %v58
    %s108 = sld [smem:[#allocation6 + $0x4]]
    %v109 = vstv %s108
    %v110 = vadd.f32 %v107, %v109
    %v111 = vtanh.pop %v110
    %s112 = sld [smem:[#allocation8 + $0x4]]
    %v113 = vstv %s112
    %v114 = vmul.f32 %v113, %v111
    %v115 = vadd.f32 %v104, %v114
    %s116 = sld [smem:[#allocation3 + $0x5]]
    %v117 = vstv %s116
    %v118 = vmul.f32 %v117, %v58
    %s119 = sld [smem:[#allocation6 + $0x5]]
    %v120 = vstv %s119
    %v121 = vadd.f32 %v118, %v120
    %v122 = vtanh.pop %v121
    %s123 = sld [smem:[#allocation8 + $0x5]]
    %v124 = vstv %s123
    %v125 = vmul.f32 %v124, %v122
    %v126 = vadd.f32 %v115, %v125
    %s127 = sld [smem:[#allocation3 + $0x6]]
    %v128 = vstv %s127
    %v129 = vmul.f32 %v128, %v58
    %s130 = sld [smem:[#allocation6 + $0x6]]
    %v131 = vstv %s130
    %v132 = vadd.f32 %v129, %v131
    %v133 = vtanh.pop %v132
    %s134 = sld [smem:[#allocation8 + $0x6]]
    %v135 = vstv %s134
    %v136 = vmul.f32 %v135, %v133
    %v137 = vadd.f32 %v126, %v136
    %s138 = sld [smem:[#allocation3 + $0x7]]
    %v139 = vstv %s138
    %v140 = vmul.f32 %v139, %v58
    %s141 = sld [smem:[#allocation6 + $0x7]]
    %v142 = vstv %s141
    %v143 = vadd.f32 %v140, %v142
    %v144 = vtanh.pop %v143
    %s145 = sld [smem:[#allocation8 + $0x7]]
    %v146 = vstv %s145
    %v147 = vmul.f32 %v146, %v144
    %v148 = vadd.f32 %v137, %v147
    %s149 = sld [smem:[#allocation3 + $0x8]]
    %v150 = vstv %s149
    %v151 = vmul.f32 %v150, %v58
    %s152 = sld [smem:[#allocation6 + $0x8]]
    %v153 = vstv %s152
    %v154 = vadd.f32 %v151, %v153
    %v155 = vtanh.pop %v154
    %s156 = sld [smem:[#allocation8 + $0x8]]
    %v157 = vstv %s156
    %v158 = vmul.f32 %v157, %v155
    %v159 = vadd.f32 %v148, %v158
    %s160 = sld [smem:[#allocation3 + $0x9]]
    %v161 = vstv %s160
    %v162 = vmul.f32 %v161, %v58
    %s163 = sld [smem:[#allocation6 + $0x9]]
    %v164 = vstv %s163
    %v165 = vadd.f32 %v162, %v164
    %v166 = vtanh.pop %v165
    %s167 = sld [smem:[#allocation8 + $0x9]]
    %v168 = vstv %s167
    %v169 = vmul.f32 %v168, %v166
    %v170 = vadd.f32 %v159, %v169
    %s171 = sld [smem:[#allocation3 + $0xa]]
    %v172 = vstv %s171
    %v173 = vmul.f32 %v172, %v58
    %s174 = sld [smem:[#allocation6 + $0xa]]
    %v175 = vstv %s174
    %v176 = vadd.f32 %v173, %v175
    %v177 = vtanh.pop %v176
    %s178 = sld [smem:[#allocation8 + $0xa]]
    %v179 = vstv %s178
    %v180 = vmul.f32 %v179, %v177
    %v181 = vadd.f32 %v170, %v180
    %s182 = sld [smem:[#allocation3 + $0xb]]
    %v183 = vstv %s182
    %v184 = vmul.f32 %v183, %v58
    %s185 = sld [smem:[#allocation6 + $0xb]]
    %v186 = vstv %s185
    %v187 = vadd.f32 %v184, %v186
    %v188 = vtanh.pop %v187
    %s189 = sld [smem:[#allocation8 + $0xb]]
    %v190 = vstv %s189
    %v191 = vmul.f32 %v190, %v188
    %v192 = vadd.f32 %v181, %v191
    %s193 = sld [smem:[#allocation3 + $0xc]]
    %v194 = vstv %s193
    %v195 = vmul.f32 %v194, %v58
    %s196 = sld [smem:[#allocation6 + $0xc]]
    %v197 = vstv %s196
    %v198 = vadd.f32 %v195, %v197
    %v199 = vtanh.pop %v198
    %s200 = sld [smem:[#allocation8 + $0xc]]
    %v201 = vstv %s200
    %v202 = vmul.f32 %v201, %v199
    %v203 = vadd.f32 %v192, %v202
    %s204 = sld [smem:[#allocation3 + $0xd]]
    %v205 = vstv %s204
    %v206 = vmul.f32 %v205, %v58
    %s207 = sld [smem:[#allocation6 + $0xd]]
    %v208 = vstv %s207
    %v209 = vadd.f32 %v206, %v208
    %v210 = vtanh.pop %v209
    %s211 = sld [smem:[#allocation8 + $0xd]]
    %v212 = vstv %s211
    %v213 = vmul.f32 %v212, %v210
    %v214 = vadd.f32 %v203, %v213
    %s215 = sld [smem:[#allocation3 + $0xe]]
    %v216 = vstv %s215
    %v217 = vmul.f32 %v216, %v58
    %s218 = sld [smem:[#allocation6 + $0xe]]
    %v219 = vstv %s218
    %v220 = vadd.f32 %v217, %v219
    %v221 = vtanh.pop %v220
    %s222 = sld [smem:[#allocation8 + $0xe]]
    %v223 = vstv %s222
    %v224 = vmul.f32 %v223, %v221
    %v225 = vadd.f32 %v214, %v224
    %s226 = sld [smem:[#allocation3 + $0xf]]
    %v227 = vstv %s226
    %v228 = vmul.f32 %v227, %v58
    %s229 = sld [smem:[#allocation6 + $0xf]]
    %v230 = vstv %s229
    %v231 = vadd.f32 %v228, %v230
    %v232 = vtanh.pop %v231
    %s233 = sld [smem:[#allocation8 + $0xf]]
    %v234 = vstv %s233
    %v235 = vmul.f32 %v234, %v232
    %v236 = vadd.f32 %v225, %v235
    %vm237 = vcmask 57344
    %238 = vst.msk [vmem:[#allocation9] sm:$0x1] %vm237, %v236
    // Predicated region
    $region34: #{tpu_custom_call.1} parent=1 // pred_check
      _
    $region35: #{tpu_custom_call.1} parent=1 // pred_check_branch
      %240 = sbr.rel (0) target = $region37
    $region36: #{tpu_custom_call.1} parent=1 // pred_region
      %s242 = ssub.s32 16, 16
      %243 = vsyncadd [#allocation4], %s242
      %s245 = sshll.u32 [#allocation9], 4
      %s246 = int_to_ptr.vmem [resolvable:$true] %s245
      %248 = dma.vmem_to_hbm [thread:$0]  %s246, 16, %s5, [#allocation4]
    $region37: #{tpu_custom_call.1} parent=1 // pred_fallthru
      _
    // Predicated region
    $region38: #{tpu_custom_call.1} parent=1 // pred_check
      _
    $region39: #{tpu_custom_call.1} parent=1 // pred_check_branch
      %250 = sbr.rel (0) target = $region41
    $region40: #{tpu_custom_call.1} parent=1 // pred_region
      %251 = dma.done [#allocation4], 16
    $region41: #{tpu_custom_call.1} parent=1 // pred_fallthru
      _
    %252 = vsyncpa [#allocation4], 1
    %253 = vsyncpa [#allocation5], 1
    %254 = vsyncpa [#allocation7], 1

</llo_original>
